<compile_context>
chip_gen: v7x
topology: tpu7x:2x2x1
jax: 0.10.0
libtpu: 0.0.40
codegen_flags: <defaults>
</compile_context>

<pallas_src>
import functools
from typing import NamedTuple

import jax
import jax.numpy as jnp
from jax.experimental import pallas as pl
from jax.experimental.pallas import tpu as pltpu

LANE = 128
_HID_FEEDBACK = 128  # hidden feedback path kept lane-dense (padded to 128 lanes)


class NetzParams(NamedTuple):
    w_step: jax.Array   # (I+H, P)      fused weights for the single-step kernel
    w_seq: jax.Array    # (I+128, P)    fused weights, zero rows for padded hidden lanes
    b: jax.Array        # (1, P)        fused bias
    n_input: int
    n_hidden: int
    n_output: int
    out_off: int        # lane offset of the output head inside the P-lane slab
    width: int          # P (128 if H+O<=128 else 256)


# ---------------------------------------------------------------------------
# Kernels
# ---------------------------------------------------------------------------

def _pack_outputs(y, n_hidden, n_output, out_off):
    """Lanes [0,H): new hidden (affine).  Lanes [out_off,out_off+O): log-softmax
    of the output head.  All other (padding) lanes: 0."""
    col = jax.lax.broadcasted_iota(jnp.int32, y.shape, 1)
    is_hid = col < n_hidden
    is_out = (col >= out_off) & (col < out_off + n_output)
    masked = jnp.where(is_out, y, jnp.float32(-jnp.inf))
    m = jnp.max(masked, axis=1, keepdims=True)
    lse = jnp.log(jnp.sum(jnp.exp(masked - m), axis=1, keepdims=True)) + m
    return jnp.where(is_hid, y, jnp.where(is_out, y - lse, 0.0))


def _netz_step_kernel(x_ref, h_ref, w_ref, b_ref, y_ref, *,
                      n_hidden, n_output, out_off):
    # concat(x, hidden) built in VMEM; ONE fused MXU dot against the (F, P) slab.
    xh = jnp.concatenate([x_ref[...], h_ref[...]], axis=1)
    y = jnp.dot(xh, w_ref[...], preferred_element_type=jnp.float32) + b_ref[...]
    y_ref[...] = _pack_outputs(y, n_hidden, n_output, out_off).astype(y_ref.dtype)


def _netz_seq_kernel(x_ref, w_ref, b_ref, y_ref, h_scratch, *,
                     n_hidden, n_output, out_off):
    t = pl.program_id(1)

    @pl.when(t == 0)
    def _():  # Netz.initHidden(): zeros, re-initialized per batch tile
        h_scratch[...] = jnp.zeros_like(h_scratch)

    # Hidden feedback stays in its padded 128-lane form between steps; weight rows
    # for lanes >= H are zero, so the log-prob / zero lanes contribute nothing.
    xh = jnp.concatenate([x_ref[0], h_scratch[...]], axis=1)
    y = jnp.dot(xh, w_ref[...], preferred_element_type=jnp.float32) + b_ref[...]
    res = _pack_outputs(y, n_hidden, n_output, out_off)
    h_scratch[...] = res[:, :_HID_FEEDBACK]
    y_ref[...] = res.astype(y_ref.dtype)  # output block resident; HBM write at tile end


# ---------------------------------------------------------------------------
# Wrappers
# ---------------------------------------------------------------------------

def _round_up(n, m):
    return (n + m - 1) // m * m


def _batch_tiling(B):
    """Return (tile_rows, padded_batch): 8-sublane aligned, tile capped at 512 rows,
    and >= 2 grid steps whenever the batch allows (v7x dual-TC sharding)."""
    B8 = _round_up(max(B, 1), 8)
    if B8 <= 8:
        tb = B8
    else:
        tb = min(512, _round_up(-(-B8 // 2), 8))
    return tb, _round_up(B8, tb)


def _pad_axis(a, axis, size):
    pad = size - a.shape[axis]
    if pad == 0:
        return a
    widths = [(0, 0)] * a.ndim
    widths[axis] = (0, pad)
    return jnp.pad(a, widths)


def pack_params(w_hid, b_hid, w_out, b_out):
    """Build the fused lane-dense weight/bias slabs ONCE (hoisted out of the
    per-step path).  w_hid: (I+H, H), w_out: (I+H, O), biases (1, X) or (X,)."""
    F, H = w_hid.shape
    O = w_out.shape[1]
    I = F - H
    assert w_out.shape[0] == F
    assert 1 <= H <= LANE and 1 <= O <= LANE, "heads wider than 128 lanes unsupported"

    if H + O <= LANE:
        P, out_off = LANE, H          # both heads packed into one 128-lane slab
    else:
        P, out_off = 2 * LANE, LANE   # two aligned 128-lane regions

    b_hid = jnp.reshape(b_hid, (1, -1)).astype(jnp.float32)
    b_out = jnp.reshape(b_out, (1, -1)).astype(jnp.float32)

    w_step = jnp.zeros((F, P), jnp.float32)
    w_step = w_step.at[:, :H].set(w_hid.astype(jnp.float32))
    w_step = w_step.at[:, out_off:out_off + O].set(w_out.astype(jnp.float32))
    b = jnp.zeros((1, P), jnp.float32)
    b = b.at[:, :H].set(b_hid)
    b = b.at[:, out_off:out_off + O].set(b_out)

    # seq variant: hidden feedback occupies rows [I, I+128); rows >= I+H are zero.
    w_seq = jnp.zeros((I + _HID_FEEDBACK, P), jnp.float32)
    w_seq = w_seq.at[:I].set(w_step[:I])
    w_seq = w_seq.at[I:I + H].set(w_step[I:])

    return NetzParams(w_step, w_seq, b, I, H, O, out_off, P)


def netz_forward(params, x, hidden):
    """Single Netz.forward step: returns (log_probs (B,O), new_hidden (B,H))."""
    B, I = x.shape
    H, O, P = params.n_hidden, params.n_output, params.width
    assert I == params.n_input and hidden.shape == (B, H)
    tb, Bp = _batch_tiling(B)
    xp = _pad_axis(x.astype(jnp.float32), 0, Bp)
    hp = _pad_axis(hidden.astype(jnp.float32), 0, Bp)
    F = I + H

    kernel = functools.partial(_netz_step_kernel, n_hidden=H, n_output=O,
                               out_off=params.out_off)
    y = pl.pallas_call(
        kernel,
        out_shape=jax.ShapeDtypeStruct((Bp, P), jnp.float32),
        grid=(Bp // tb,),
        in_specs=[
            pl.BlockSpec((tb, I), lambda i: (i, 0)),   # x tile
            pl.BlockSpec((tb, H), lambda i: (i, 0)),   # hidden tile
            pl.BlockSpec((F, P), lambda i: (0, 0)),    # fused weights, VMEM resident
            pl.BlockSpec((1, P), lambda i: (0, 0)),    # fused bias, VMEM resident
        ],
        out_specs=pl.BlockSpec((tb, P), lambda i: (i, 0)),
        compiler_params=pltpu.CompilerParams(dimension_semantics=("parallel",)),
    )(xp, hp, params.w_step, params.b)

    out = y[:B, params.out_off:params.out_off + O]
    new_hidden = y[:B, :H]
    return out, new_hidden


def netz_forward_seq(params, xs):
    """Whole sequence in ONE pallas_call (time loop folded into the grid).

    xs: (T, B, I).  Hidden starts at zeros (Netz.initHidden) and lives in a
    persistent VMEM scratch.  Returns the final step's (log_probs, hidden),
    identical to looping Netz.forward over t.
    """
    T, B, I = xs.shape
    H, O, P = params.n_hidden, params.n_output, params.width
    assert I == params.n_input
    tb, Bp = _batch_tiling(B)
    xsp = _pad_axis(xs.astype(jnp.float32), 1, Bp)
    Fs = I + _HID_FEEDBACK

    kernel = functools.partial(_netz_seq_kernel, n_hidden=H, n_output=O,
                               out_off=params.out_off)
    y = pl.pallas_call(
        kernel,
        out_shape=jax.ShapeDtypeStruct((Bp, P), jnp.float32),
        grid=(Bp // tb, T),
        in_specs=[
            pl.BlockSpec((1, tb, I), lambda b, t: (t, b, 0)),  # per-step x tile
            pl.BlockSpec((Fs, P), lambda b, t: (0, 0)),        # weights, resident
            pl.BlockSpec((1, P), lambda b, t: (0, 0)),         # bias, resident
        ],
        out_specs=pl.BlockSpec((tb, P), lambda b, t: (b, 0)),  # final-step slab
        scratch_shapes=[pltpu.VMEM((tb, _HID_FEEDBACK), jnp.float32)],
        compiler_params=pltpu.CompilerParams(
            dimension_semantics=("parallel", "arbitrary")),
    )(xsp, params.w_seq, params.b)

    out = y[:B, params.out_off:params.out_off + O]
    hidden = y[:B, :H]
    return out, hidden


# ---------------------------------------------------------------------------
# Init helpers (PyTorch-style)
# ---------------------------------------------------------------------------

def init_params(key, n_input, n_hidden, n_output):
    fan_in = n_input + n_hidden
    bound = 1.0 / jnp.sqrt(jnp.float32(fan_in))
    k1, k2, k3, k4 = jax.random.split(key, 4)
    # stored as (in, out): torch's (out, in) weight transposed
    w_hid = jax.random.uniform(k1, (fan_in, n_hidden), jnp.float32, -bound, bound)
    b_hid = jax.random.uniform(k2, (1, n_hidden), jnp.float32, -bound, bound)
    w_out = jax.random.uniform(k3, (fan_in, n_output), jnp.float32, -bound, bound)
    b_out = jax.random.uniform(k4, (1, n_output), jnp.float32, -bound, bound)
    return w_hid, b_hid, w_out, b_out


def init_hidden(batch, n_hidden):
    # Netz.initHidden returns zeros(1, hiddens); generalized to batch rows.
    return jnp.zeros((batch, n_hidden), jnp.float32)


if __name__ == "__main__":
    B, N_INPUT, N_HIDDEN, N_OUTPUT, T = 2, 16, 32, 8, 8

    key = jax.random.PRNGKey(0)
    kx, kp, ks = jax.random.split(key, 3)
    x = jax.random.normal(kx, (B, N_INPUT), jnp.float32)
    hidden0 = init_hidden(B, N_HIDDEN)
    w_hid, b_hid, w_out, b_out = init_params(kp, N_INPUT, N_HIDDEN, N_OUTPUT)
    params = pack_params(w_hid, b_hid, w_out, b_out)   # built once, reused

    # --- single step (Netz.forward semantics) ---
    out, new_hidden = netz_forward(params, x, hidden0)
    jax.block_until_ready((out, new_hidden))

    xh = jnp.concatenate([x, hidden0], axis=1)
    ref_hidden = xh @ w_hid + b_hid
    ref_out = jax.nn.log_softmax(xh @ w_out + b_out, axis=1)
    assert jnp.allclose(out, ref_out, atol=1e-5), "log_softmax mismatch"
    assert jnp.allclose(new_hidden, ref_hidden, atol=1e-5), "hidden mismatch"

    # --- fused time loop (T forward steps in one kernel) ---
    xs = jax.random.normal(ks, (T, B, N_INPUT), jnp.float32)
    seq_out, seq_hidden = netz_forward_seq(params, xs)
    jax.block_until_ready((seq_out, seq_hidden))

    h = hidden0
    for t in range(T):
        xh_t = jnp.concatenate([xs[t], h], axis=1)
        o = jax.nn.log_softmax(xh_t @ w_out + b_out, axis=1)
        h = xh_t @ w_hid + b_hid
    assert jnp.allclose(seq_out, o, atol=1e-4), "seq log_softmax mismatch"
    assert jnp.allclose(seq_hidden, h, atol=1e-4), "seq hidden mismatch"

    print("KERNEL_OK")
</pallas_src>

<mosaic_0001>
module attributes {stable_mosaic.version = 11 : i64} {
  func.func @_netz_step_kernel(%arg0: i32, %arg1: memref<8x16xf32, #tpu.memory_space<vmem>>, %arg2: memref<8x32xf32, #tpu.memory_space<vmem>>, %arg3: memref<48x128xf32, #tpu.memory_space<vmem>>, %arg4: memref<1x128xf32, #tpu.memory_space<vmem>>, %arg5: memref<8x128xf32, #tpu.memory_space<vmem>>) attributes {dimension_semantics = [#tpu.dimension_semantics<parallel>], iteration_bounds = array<i64: 1>, scalar_prefetch = 0 : i64, scratch_operands = 0 : i64, tpu.core_type = #tpu.core_type<tc>, window_params = [{transform_indices = @transform_0, window_bounds = array<i64: 8, 16>}, {transform_indices = @transform_1, window_bounds = array<i64: 8, 32>}, {pipeline_mode = #tpu.pipeline_mode<synchronous>, transform_indices = @transform_2, window_bounds = array<i64: 48, 128>}, {pipeline_mode = #tpu.pipeline_mode<synchronous>, transform_indices = @transform_3, window_bounds = array<i64: 1, 128>}, {transform_indices = @transform_4, window_bounds = array<i64: 8, 128>}]} {
    %c0 = arith.constant 0 : index
    %c0_0 = arith.constant 0 : index
    %0 = vector.load %arg1[%c0, %c0_0] : memref<8x16xf32, #tpu.memory_space<vmem>>, vector<8x16xf32>
    %c0_1 = arith.constant 0 : index
    %c0_2 = arith.constant 0 : index
    %1 = vector.load %arg2[%c0_1, %c0_2] : memref<8x32xf32, #tpu.memory_space<vmem>>, vector<8x32xf32>
    %2 = tpu.concatenate %0, %1 in 1 : vector<8x16xf32>, vector<8x32xf32> -> vector<8x48xf32>
    %c0_3 = arith.constant 0 : index
    %c0_4 = arith.constant 0 : index
    %3 = vector.load %arg3[%c0_3, %c0_4] : memref<48x128xf32, #tpu.memory_space<vmem>>, vector<48x128xf32>
    %cst = arith.constant dense<0.000000e+00> : vector<8x128xf32>
    %4 = tpu.matmul %2, %3, %cst {dimension_numbers = #tpu.dot_dimension_numbers<[1], [0], [0], [1], [0, 0, 1, 1], [], []>} : vector<8x48xf32>, vector<48x128xf32>, vector<8x128xf32> -> vector<8x128xf32>
    %c0_5 = arith.constant 0 : index
    %c0_6 = arith.constant 0 : index
    %5 = vector.load %arg4[%c0_5, %c0_6] : memref<1x128xf32, #tpu.memory_space<vmem>>, vector<1x128xf32>
    %6 = vector.broadcast %5 : vector<1x128xf32> to vector<8x128xf32>
    %7 = arith.addf %4, %6 : vector<8x128xf32>
    %8 = tpu.iota {dimensions = array<i32: 1>} : vector<8x128xi32>
    %c32_i32 = arith.constant 32 : i32
    %9 = vector.broadcast %c32_i32 : i32 to vector<8x128xi32>
    %10 = arith.cmpi slt, %8, %9 : vector<8x128xi32>
    %c32_i32_7 = arith.constant 32 : i32
    %11 = vector.broadcast %c32_i32_7 : i32 to vector<8x128xi32>
    %12 = arith.cmpi sge, %8, %11 : vector<8x128xi32>
    %c40_i32 = arith.constant 40 : i32
    %13 = vector.broadcast %c40_i32 : i32 to vector<8x128xi32>
    %14 = arith.cmpi slt, %8, %13 : vector<8x128xi32>
    %15 = arith.andi %12, %14 : vector<8x128xi1>
    %cst_8 = arith.constant 0xFF800000 : f32
    %16 = vector.broadcast %cst_8 : f32 to vector<8x128xf32>
    %17 = arith.select %15, %7, %16 : vector<8x128xi1>, vector<8x128xf32>
    %cst_9 = arith.constant dense<0xFF800000> : vector<8xf32>
    %18 = vector.multi_reduction <maximumf>, %17, %cst_9 [1] : vector<8x128xf32> to vector<8xf32>
    %19 = vector.shape_cast %18 : vector<8xf32> to vector<8x1xf32>
    %20 = vector.broadcast %19 : vector<8x1xf32> to vector<8x128xf32>
    %21 = arith.subf %17, %20 : vector<8x128xf32>
    %22 = math.exp %21 : vector<8x128xf32>
    %cst_10 = arith.constant dense<0.000000e+00> : vector<8xf32>
    %23 = vector.multi_reduction <add>, %22, %cst_10 [1] : vector<8x128xf32> to vector<8xf32>
    %24 = vector.shape_cast %23 : vector<8xf32> to vector<8x1xf32>
    %25 = math.log %24 : vector<8x1xf32>
    %26 = arith.addf %25, %19 : vector<8x1xf32>
    %27 = vector.broadcast %26 : vector<8x1xf32> to vector<8x128xf32>
    %28 = arith.subf %7, %27 : vector<8x128xf32>
    %cst_11 = arith.constant 0.000000e+00 : f32
    %29 = vector.broadcast %cst_11 : f32 to vector<8x128xf32>
    %30 = arith.select %15, %28, %29 : vector<8x128xi1>, vector<8x128xf32>
    %31 = arith.select %10, %7, %30 : vector<8x128xi1>, vector<8x128xf32>
    %c0_12 = arith.constant 0 : index
    %c0_13 = arith.constant 0 : index
    %32 = vector.load %arg5[%c0_12, %c0_13] : memref<8x128xf32, #tpu.memory_space<vmem>>, vector<8x128xf32>
    tpu.vector_store %arg5[%c0_12, %c0_13], %31 {strides = array<i32>} : memref<8x128xf32, #tpu.memory_space<vmem>>, vector<8x128xf32>,
    return
  }
  func.func @transform_0(%arg0: i32) -> (i32, i32) {
    %c0_i32 = arith.constant 0 : i32
    %c0_i32_0 = arith.constant 0 : i32
    return %arg0, %c0_i32 : i32, i32
  }
  func.func @transform_1(%arg0: i32) -> (i32, i32) {
    %c0_i32 = arith.constant 0 : i32
    %c0_i32_0 = arith.constant 0 : i32
    return %arg0, %c0_i32 : i32, i32
  }
  func.func @transform_2(%arg0: i32) -> (i32, i32) {
    %c0_i32 = arith.constant 0 : i32
    %c0_i32_0 = arith.constant 0 : i32
    %c0_i32_1 = arith.constant 0 : i32
    return %c0_i32, %c0_i32_0 : i32, i32
  }
  func.func @transform_3(%arg0: i32) -> (i32, i32) {
    %c0_i32 = arith.constant 0 : i32
    %c0_i32_0 = arith.constant 0 : i32
    %c0_i32_1 = arith.constant 0 : i32
    return %c0_i32, %c0_i32_0 : i32, i32
  }
  func.func @transform_4(%arg0: i32) -> (i32, i32) {
    %c0_i32 = arith.constant 0 : i32
    %c0_i32_0 = arith.constant 0 : i32
    return %arg0, %c0_i32 : i32, i32
  }
}

</mosaic_0001>

<llo_original>
// kernel: tpu_custom_call.1
$region0: #{tpu_custom_call.1}
  #allocation0 [shape = 'u32[]', space=smem, size = 0x4, offset = 0x4, fixed_abs, tag = 'smem constant byte address 0x4 - core index']
  #allocation1 [shape = 'u32[144,128]{1,0:T(1,128)}', space=vmem, size = 0x12000, scoped, tag = 'internal scratch']
  %s0 = inlined_call_operand.hbm [shape: f32[8,16], index: 0, kind: input, shape index: {}]
  %s1 = inlined_call_operand.hbm [shape: f32[8,32], index: 1, kind: input, shape index: {}]
  %s2 = inlined_call_operand.hbm [shape: f32[48,128], index: 2, kind: input, shape index: {}]
  %s3 = inlined_call_operand.vmem [shape: f32[1,128], index: 3, kind: input, shape index: {}]
  %s4 = inlined_call_operand.hbm [shape: f32[8,128], index: 4, kind: output, shape index: {}]
  %s5 = sld [smem:[#allocation0]]
  $region38: #{tpu_custom_call.1} parent=0
    _
  %s7 = ssub.s32 1, %s5
  %s8 = scalar_select 0, %s7, %s5
  $region1: #{tpu_custom_call.1} parent=0
    #allocation2 [shape = 'u8[4096]{0}', space=vmem, size = 0x1000, scoped, tag = 'input window, operand 0, single buffered']
    #allocation3 [shape = 's32[1]{0}', space=sflag, size = 0x4, scoped, tag = 'scoped memory for tpu_custom_call.1']
    #allocation4 [shape = 's32[1]{0}', space=sflag, size = 0x4, scoped, tag = 'scoped memory for tpu_custom_call.1']
    #allocation5 [shape = 'u8[4096]{0}', space=vmem, size = 0x1000, scoped, tag = 'input window, operand 1, single buffered']
    #allocation6 [shape = 's32[1]{0}', space=sflag, size = 0x4, scoped, tag = 'scoped memory for tpu_custom_call.1']
    #allocation7 [shape = 'u8[24576]{0}', space=vmem, size = 0x6000, scoped, tag = 'input window, operand 2, single buffered']
    #allocation8 [shape = 'u8[4096]{0}', space=vmem, size = 0x1000, scoped, tag = 'output window, operand 0, single buffered']
    %9 = vsyncpa [#allocation3], 0
    %10 = vsyncpa [#allocation6], 0
    %11 = vsyncpa [#allocation4], 0
    // Predicated region
    $region2: #{tpu_custom_call.1} parent=1 // pred_check
      _
    $region3: #{tpu_custom_call.1} parent=1 // pred_check_branch
      %13 = sbr.rel (0) target = $region5
    $region4: #{tpu_custom_call.1} parent=1 // pred_region
      %s15 = ssub.s32 128, 128
      %16 = vsyncadd [#allocation3], %s15
      %s18 = sshll.u32 [#allocation2], 4
      %s19 = int_to_ptr.vmem [resolvable:$true] %s18
      %21 = dma.hbm_to_vmem [thread:$0]  %s0, 128, %s19, [#allocation3]
    $region5: #{tpu_custom_call.1} parent=1 // pred_fallthru
      _
    // Predicated region
    $region6: #{tpu_custom_call.1} parent=1 // pred_check
      _
    $region7: #{tpu_custom_call.1} parent=1 // pred_check_branch
      %23 = sbr.rel (0) target = $region9
    $region8: #{tpu_custom_call.1} parent=1 // pred_region
      %s25 = ssub.s32 128, 128
      %26 = vsyncadd [#allocation6], %s25
      %s28 = sshll.u32 [#allocation5], 4
      %s29 = int_to_ptr.vmem [resolvable:$true] %s28
      %31 = dma.hbm_to_vmem [thread:$0]  %s1, 128, %s29, [#allocation6]
    $region9: #{tpu_custom_call.1} parent=1 // pred_fallthru
      _
    // Predicated region
    $region10: #{tpu_custom_call.1} parent=1 // pred_check
      _
    $region11: #{tpu_custom_call.1} parent=1 // pred_check_branch
      %33 = sbr.rel (0) target = $region13
    $region12: #{tpu_custom_call.1} parent=1 // pred_region
      %s35 = ssub.s32 768, 768
      %36 = vsyncadd [#allocation6], %s35
      %s37 = sshll.u32 [#allocation7], 4
      %s38 = int_to_ptr.vmem [resolvable:$true] %s37
      %43 = dma.hbm_to_vmem [thread:$0]  %s2, 768, %s38, [#allocation6], 128, 128, 8
    $region13: #{tpu_custom_call.1} parent=1 // pred_fallthru
      _
    // Predicated region
    $region14: #{tpu_custom_call.1} parent=1 // pred_check
      _
    $region15: #{tpu_custom_call.1} parent=1 // pred_check_branch
      %45 = sbr.rel (0) target = $region17
    $region16: #{tpu_custom_call.1} parent=1 // pred_region
      _
    $region17: #{tpu_custom_call.1} parent=1 // pred_fallthru
      _
    // Predicated region
    $region18: #{tpu_custom_call.1} parent=1 // pred_check
      _
    $region19: #{tpu_custom_call.1} parent=1 // pred_check_branch
      %47 = sbr.rel (0) target = $region21
    $region20: #{tpu_custom_call.1} parent=1 // pred_region
      %48 = dma.done [#allocation3], 128
    $region21: #{tpu_custom_call.1} parent=1 // pred_fallthru
      _
    // Predicated region
    $region22: #{tpu_custom_call.1} parent=1 // pred_check
      _
    $region23: #{tpu_custom_call.1} parent=1 // pred_check_branch
      %50 = sbr.rel (0) target = $region25
    $region24: #{tpu_custom_call.1} parent=1 // pred_region
      %51 = dma.done [#allocation6], 128
    $region25: #{tpu_custom_call.1} parent=1 // pred_fallthru
      _
    // Predicated region
    $region26: #{tpu_custom_call.1} parent=1 // pred_check
      _
    $region27: #{tpu_custom_call.1} parent=1 // pred_check_branch
      %53 = sbr.rel (0) target = $region29
    $region28: #{tpu_custom_call.1} parent=1 // pred_region
      %54 = dma.done [#allocation6], 768
    $region29: #{tpu_custom_call.1} parent=1 // pred_fallthru
      _
    %v55 = vld [vmem:[#allocation2] sm:$0xff]
    %v56 = vld [vmem:[#allocation5] sm:$0xff]
    %58 = vrot.lane.b32.xlu0 %v56, 16
    %v59 = vpop.permute.xlu0 %58
    %vm61 = vcmask 130048
    %v62 = vsel %vm61, %v55, %v59
    %v63 = vld [vmem:[#allocation7] sm:$0xff]
    %v64 = vld [vmem:[#allocation7 + $0x8] sm:$0xff]
    %v65 = vld [vmem:[#allocation7 + $0x10] sm:$0xff]
    %v66 = vld [vmem:[#allocation7 + $0x18] sm:$0xff]
    %v67 = vld [vmem:[#allocation7 + $0x20] sm:$0xff]
    %v68 = vld [vmem:[#allocation7 + $0x28] sm:$0xff]
    %v69 = vld [vmem:[%s3] sm:$0x1]
    %v71 = vlaneseq
    %v72 = vshrl.u32 %v71, 7
    %v73 = vsub.s32 0, %v72
    %v74 = vrot.slane %v69, %v73
    %vm76 = vcmask 392192
    %v78 = vsel %vm76, %v62, 0
    %80 = vmatprep.subr.mxu0 0.0
    %81 = vmatpush1.msra.mxu0 %v63
    %82 = vmatprep.subr.mxu0 0.0
    %83 = vmatpush1.msra.mxu0 %v64
    %84 = vmatprep.subr.mxu0 0.0
    %85 = vmatpush1.msra.mxu0 %v65
    %86 = vmatprep.subr.mxu0 0.0
    %87 = vmatpush1.msra.mxu0 %v66
    %88 = vmatprep.subr.mxu0 0.0
    %89 = vmatpush1.msra.mxu0 %v67
    %90 = vmatprep.subr.mxu0 0.0
    %91 = vmatpush1.msra.mxu0 %v68
    %92 = vmatprep.subr.mxu0 0.0
    %93 = vmatpush1.msra.mxu0 0.0
    %94 = vmatprep.subr.mxu0 0.0
    %95 = vmatpush1.msra.mxu0 0.0
    %96 = vmatprep.subr.mxu0 0.0
    %97 = vmatpush1.msra.mxu0 0.0
    %98 = vmatprep.subr.mxu0 0.0
    %99 = vmatpush1.msra.mxu0 0.0
    %100 = vmatprep.subr.mxu0 0.0
    %101 = vmatpush1.msra.mxu0 0.0
    %102 = vmatprep.subr.mxu0 0.0
    %103 = vmatpush1.msra.mxu0 0.0
    %104 = vmatprep.subr.mxu0 0.0
    %105 = vmatpush1.msra.mxu0 0.0
    %106 = vmatprep.subr.mxu0 0.0
    %107 = vmatpush1.msra.mxu0 0.0
    %108 = vmatprep.subr.mxu0 0.0
    %109 = vmatpush1.msra.mxu0 0.0
    %110 = vmatprep.subr.mxu0 0.0
    %111 = vmatpush1.msra.mxu0 0.0
    %112 = vmatprep.subr.mxu0 0.0
    %113 = vmatpush1.msra.mxu0 0.0
    %114 = vmatprep.subr.mxu0 0.0
    %115 = vmatpush1.msra.mxu0 0.0
    %116 = vmatprep.subr.mxu0 0.0
    %117 = vmatpush1.msra.mxu0 0.0
    %118 = vmatprep.subr.mxu0 0.0
    %119 = vmatpush1.msra.mxu0 0.0
    %120 = vmatprep.subr.mxu0 0.0
    %121 = vmatpush1.msra.mxu0 0.0
    %122 = vmatprep.subr.mxu0 0.0
    %123 = vmatpush1.msra.mxu0 0.0
    %124 = vmatprep.subr.mxu0 0.0
    %125 = vmatpush1.msra.mxu0 0.0
    %126 = vmatprep.subr.mxu0 0.0
    %127 = vmatpush1.msra.mxu0 0.0
    %128 = vmatprep.subr.mxu0 0.0
    %129 = vmatpush1.msra.mxu0 0.0
    %130 = vmatprep.subr.mxu0 0.0
    %131 = vmatpush1.msra.mxu0 0.0
    %132 = vmatprep.subr.mxu0 0.0
    %133 = vmatpush1.msra.mxu0 0.0
    %134 = vmatprep.subr.mxu0 0.0
    %135 = vmatpush1.msra.mxu0 0.0
    %136 = vmatprep.subr.mxu0 0.0
    %137 = vmatpush1.msra.mxu0 0.0
    %138 = vmatprep.subr.mxu0 0.0
    %139 = vmatpush1.msra.mxu0 0.0
    %140 = vmatprep.subr.mxu0 0.0
    %141 = vmatpush1.msra.mxu0 0.0
    %142 = vmatprep.subr.mxu0 0.0
    %143 = vmatpush1.msra.mxu0 0.0
    %144 = vmatprep.mubr.f32.mxu0 0.0
    %145 = vmatmul.mubr.f32.gmra.mrb[0].mxu0 %v78
    %v146 = vpop.f32.mrb[0].mxu0
    %v147 = vadd.f32 %v74, %v146
    %v148 = vpop.f32.mrb[0].mxu0
    %149 = vdwg.mxu0
    %v150 = vlaneseq
    %v151 = vand.u32 %v150, 127
    %vm152 = vcmp.lt.s32.totalorder %v151, 32
    %vm153 = vcmp.ge.s32.totalorder %v151, 32
    %vm154 = vcmp.lt.s32.totalorder %v151, 40
    %vm155 = vmand %vm153, %vm154
    %v156 = vsel %vm155, %v147, -inf
    %157 = vmax.xlane.f32.xlu0 %v156
    %v158 = vpop.xlane.xlu0 %157
    %v159 = vsub.f32 %v156, %v158
    %v160 = vmul.f32 %v159, 1.442695
    %v161 = vpow.pop %v160
    %162 = vadd.xlane.f32.xlu0 %v161
    %v163 = vpop.xlane.xlu0 %162
    %v164 = vlog2.pop %v163
    %v165 = vmul.f32 %v164, 0.6931472
    %v166 = vadd.f32 %v165, %v158
    %v167 = vsub.f32 %v147, %v166
    %v168 = vsel %vm155, %v167, 0.0
    %v169 = vsel %vm152, %v147, %v168
    %170 = vst [vmem:[#allocation8] sm:$0xff] %v169
    // Predicated region
    $region30: #{tpu_custom_call.1} parent=1 // pred_check
      _
    $region31: #{tpu_custom_call.1} parent=1 // pred_check_branch
      %172 = sbr.rel (0) target = $region33
    $region32: #{tpu_custom_call.1} parent=1 // pred_region
      %s174 = ssub.s32 128, 128
      %175 = vsyncadd [#allocation4], %s174
      %s177 = sshll.u32 [#allocation8], 4
      %s178 = int_to_ptr.vmem [resolvable:$true] %s177
      %180 = dma.vmem_to_hbm [thread:$0]  %s178, 128, %s4, [#allocation4]
    $region33: #{tpu_custom_call.1} parent=1 // pred_fallthru
      _
    // Predicated region
    $region34: #{tpu_custom_call.1} parent=1 // pred_check
      _
    $region35: #{tpu_custom_call.1} parent=1 // pred_check_branch
      %182 = sbr.rel (0) target = $region37
    $region36: #{tpu_custom_call.1} parent=1 // pred_region
      %183 = dma.done [#allocation4], 128
    $region37: #{tpu_custom_call.1} parent=1 // pred_fallthru
      _
    %184 = vsyncpa [#allocation3], 1
    %185 = vsyncpa [#allocation6], 1
    %186 = vsyncpa [#allocation4], 1

</llo_original>
